<compile_context>
chip_gen: v5e
topology: v5e:2x2
jax: 0.10.0
libtpu: 0.0.40
codegen_flags: <defaults>
</compile_context>

<pallas_src>
import jax
import jax.numpy as jnp
from jax.experimental import pallas as pl
from jax.experimental.pallas import tpu as pltpu

_LANES = 512                     # lane-dense width (multiple of 128)
_UPDATE_ROW_CAP = 1024           # rows per block for reduction kernels (2 MiB f32 tile)
_AFFINE_ROW_CAP = 1024           # rows per block for normalize/denormalize
_VMEM_LIMIT = 32 * 1024 * 1024   # explicit scoped-VMEM budget; fits v5e/v6e/v7x


def _round_up(a, b):
    return ((a + b - 1) // b) * b


def _tile_geometry(total, row_cap, n_splits):
    """Padded rows R, lanes C and row-tile tm for a flattened array of `total` elems."""
    c = _LANES
    rows = _round_up(max(1, -(-total // c)), 8)
    tm = min(row_cap, rows)
    r = _round_up(rows, n_splits * tm)
    return r, c, tm


def _pad_reshape(a, r, c):
    flat = a.reshape(-1)
    pad = r * c - flat.size
    if pad:
        flat = jnp.pad(flat, (0, pad))
    return flat.reshape(r, c)


def _scalar_lane_block(vals):
    """(1, 8, 128) f32 block with vals[k] placed in lane k (replicated over sublanes)."""
    lane = jax.lax.broadcasted_iota(jnp.int32, (1, 8, 128), 2)
    out = jnp.zeros((1, 8, 128), jnp.float32)
    for k, v in enumerate(vals):
        out = jnp.where(lane == k, v, out)
    return out


# ----------------------------------------------------------------------------
# update(): reduction kernels
#   grid = (2, nb): leading axis = per-core halves (parallel), inner axis =
#   row blocks (arbitrary, reduction). Vector partials live in VMEM scratch;
#   the scalar reduce + output store happens once at the last inner step.
# ----------------------------------------------------------------------------
def _update_masked_kernel(x_ref, m_ref, out_ref, acc_s, acc_q, acc_c):
    @pl.when(pl.program_id(1) == 0)
    def _():
        acc_s[...] = jnp.zeros_like(acc_s)
        acc_q[...] = jnp.zeros_like(acc_q)
        acc_c[...] = jnp.zeros_like(acc_c)

    x = x_ref[...].astype(jnp.float32)
    m = m_ref[...].astype(jnp.float32)
    xm = x * m
    acc_s[...] += xm
    acc_q[...] += xm * xm
    acc_c[...] += m

    @pl.when(pl.program_id(1) == pl.num_programs(1) - 1)
    def _():
        out_ref[...] = _scalar_lane_block(
            [jnp.sum(acc_s[...]), jnp.sum(acc_q[...]), jnp.sum(acc_c[...])])


def _update_unmasked_kernel(x_ref, out_ref, acc_s, acc_q):
    @pl.when(pl.program_id(1) == 0)
    def _():
        acc_s[...] = jnp.zeros_like(acc_s)
        acc_q[...] = jnp.zeros_like(acc_q)

    x = x_ref[...].astype(jnp.float32)
    acc_s[...] += x
    acc_q[...] += x * x

    @pl.when(pl.program_id(1) == pl.num_programs(1) - 1)
    def _():
        out_ref[...] = _scalar_lane_block(
            [jnp.sum(acc_s[...]), jnp.sum(acc_q[...])])


def _masked_sums(x, mask):
    r, c, tm = _tile_geometry(x.size, _UPDATE_ROW_CAP, n_splits=2)
    nb = r // (2 * tm)
    x2 = _pad_reshape(x, r, c)
    m2 = _pad_reshape(mask, r, c)
    part = pl.pallas_call(
        _update_masked_kernel,
        out_shape=jax.ShapeDtypeStruct((2, 8, 128), jnp.float32),
        grid_spec=pltpu.PrefetchScalarGridSpec(
            num_scalar_prefetch=0,
            grid=(2, nb),
            in_specs=[
                pl.BlockSpec((tm, c), lambda h, i: (h * nb + i, 0)),
                pl.BlockSpec((tm, c), lambda h, i: (h * nb + i, 0)),
            ],
            out_specs=pl.BlockSpec((1, 8, 128), lambda h, i: (h, 0, 0)),
            scratch_shapes=[pltpu.VMEM((tm, c), jnp.float32)] * 3,
        ),
        compiler_params=pltpu.CompilerParams(
            dimension_semantics=("parallel", "arbitrary"),
            vmem_limit_bytes=_VMEM_LIMIT),
    )(x2, m2)
    sums = jnp.sum(part[:, 0, :3], axis=0)   # combine the two per-core partials
    return sums[0], sums[1], sums[2]


def _unmasked_sums(x):
    r, c, tm = _tile_geometry(x.size, _UPDATE_ROW_CAP, n_splits=2)
    nb = r // (2 * tm)
    x2 = _pad_reshape(x, r, c)
    part = pl.pallas_call(
        _update_unmasked_kernel,
        out_shape=jax.ShapeDtypeStruct((2, 8, 128), jnp.float32),
        grid_spec=pltpu.PrefetchScalarGridSpec(
            num_scalar_prefetch=0,
            grid=(2, nb),
            in_specs=[pl.BlockSpec((tm, c), lambda h, i: (h * nb + i, 0))],
            out_specs=pl.BlockSpec((1, 8, 128), lambda h, i: (h, 0, 0)),
            scratch_shapes=[pltpu.VMEM((tm, c), jnp.float32)] * 2,
        ),
        compiler_params=pltpu.CompilerParams(
            dimension_semantics=("parallel", "arbitrary"),
            vmem_limit_bytes=_VMEM_LIMIT),
    )(x2)
    sums = jnp.sum(part[:, 0, :2], axis=0)
    count = jnp.asarray(x.size, jnp.float32)   # no ones-mask DMA needed
    return sums[0], sums[1], count


# ----------------------------------------------------------------------------
# normalize() / denormalize(): fused affine kernels, stats = [scale, shift] in SMEM
#   normalize:   y = clip(x * (1/std) + (-mean/std), -5, 5)
#   denormalize: y = x * std + mean
# ----------------------------------------------------------------------------
def _affine_clip_kernel(stats_ref, x_ref, o_ref):
    scale = stats_ref[0]
    shift = stats_ref[1]
    y = x_ref[...].astype(jnp.float32) * scale + shift
    o_ref[...] = jnp.clip(y, -5.0, 5.0)


def _affine_kernel(stats_ref, x_ref, o_ref):
    o_ref[...] = x_ref[...].astype(jnp.float32) * stats_ref[0] + stats_ref[1]


def _affine_call(kernel, stats, x):
    r, c, tm = _tile_geometry(x.size, _AFFINE_ROW_CAP, n_splits=1)
    x2 = _pad_reshape(x, r, c)
    out = pl.pallas_call(
        kernel,
        out_shape=jax.ShapeDtypeStruct((r, c), jnp.float32),
        grid_spec=pltpu.PrefetchScalarGridSpec(
            num_scalar_prefetch=0,
            grid=(r // tm,),
            in_specs=[
                pl.BlockSpec(memory_space=pltpu.MemorySpace.SMEM),
                pl.BlockSpec((tm, c), lambda i: (i, 0)),
            ],
            out_specs=pl.BlockSpec((tm, c), lambda i: (i, 0)),
        ),
        compiler_params=pltpu.CompilerParams(
            dimension_semantics=("parallel",),
            vmem_limit_bytes=_VMEM_LIMIT),
    )(stats, x2)
    return out.reshape(-1)[: x.size].reshape(x.shape)


# ----------------------------------------------------------------------------
# Module wrapper (state + scalar glue)
# ----------------------------------------------------------------------------
class MovingAverageRunningMeanStd:

    def __init__(self, high_precision=True):
        del high_precision  # f64 unsupported on TPU; stats kept in f32 (see TODO above).
        self._dtype = jnp.float32
        self.reset_parameters()

    def reset_parameters(self):
        self._mean = jnp.zeros((1,), self._dtype)
        self._mean_sq = jnp.zeros((1,), self._dtype)
        self._accum_denominator = jnp.zeros((), self._dtype)

    def forward(self, *args, **kwargs):
        raise NotImplementedError()

    def update(self, x, mask=None):
        if mask is None:
            x_sum, x_sum_sq, factor = _unmasked_sums(x)
        else:
            if mask.dtype == jnp.bool_:
                mask = mask.astype(jnp.int8)   # narrow dtype over HBM; cast in-kernel
            x_sum, x_sum_sq, factor = _masked_sums(x, mask)
        denom = self._accum_denominator + factor
        self._mean = (self._accum_denominator * self._mean + x_sum) / denom
        self._mean_sq = (self._accum_denominator * self._mean_sq + x_sum_sq) / denom
        self._accum_denominator = denom

    def mean_std(self):
        var = jnp.maximum(self._mean_sq - self._mean ** 2, 0.01)
        return self._mean, jnp.sqrt(var)

    def normalize(self, x):
        mean, std = self.mean_std()
        inv_std = 1.0 / std                       # reciprocal once; kernel only multiplies
        stats = jnp.concatenate([inv_std, -mean * inv_std]).astype(jnp.float32)
        return _affine_call(_affine_clip_kernel, stats, x)

    def denormalize(self, x):
        mean, std = self.mean_std()
        stats = jnp.concatenate([std, mean]).astype(jnp.float32)
        return _affine_call(_affine_kernel, stats, x)


# ----------------------------------------------------------------------------
# Pure-JAX reference for checking
# ----------------------------------------------------------------------------
def _reference(x1, m1, x2):
    xm = x1 * m1
    f1 = m1.sum()
    mean = xm.sum() / f1
    mean_sq = (xm ** 2).sum() / f1
    f2 = jnp.asarray(x2.size, jnp.float32)
    mean = (f1 * mean + x2.sum()) / (f1 + f2)
    mean_sq = (f1 * mean_sq + (x2 ** 2).sum()) / (f1 + f2)
    std = jnp.sqrt(jnp.maximum(mean_sq - mean ** 2, 0.01))
    norm = jnp.clip((x2 - mean) / std, -5.0, 5.0)
    denorm = x2 * std + mean
    return mean, std, norm, denorm


if __name__ == "__main__":
    key = jax.random.PRNGKey(0)
    k1, k2, k3 = jax.random.split(key, 3)
    x1 = jax.random.normal(k1, (16, 128), jnp.float32) * 2.0 + 0.5
    mask1 = jax.random.uniform(k2, (16, 128)) > 0.3                    # bool mask
    x2 = jax.random.normal(k3, (4, 8, 32), jnp.float32) * 3.0 - 1.0    # exercises padding path

    rms = MovingAverageRunningMeanStd(high_precision=True)
    rms.update(x1, mask1)          # masked update (bool mask -> int8 in kernel)
    rms.update(x2)                 # unmasked update (mask-free kernel)
    mean, std = rms.mean_std()
    y_norm = rms.normalize(x2)
    y_denorm = rms.denormalize(x2)
    jax.block_until_ready((mean, std, y_norm, y_denorm))

    ref_mean, ref_std, ref_norm, ref_denorm = _reference(
        x1, mask1.astype(jnp.float32), x2)
    assert jnp.allclose(mean[0], ref_mean, rtol=1e-4, atol=1e-4)
    assert jnp.allclose(std[0], ref_std, rtol=1e-4, atol=1e-4)
    assert jnp.allclose(y_norm, ref_norm, rtol=1e-4, atol=1e-4)
    assert jnp.allclose(y_denorm, ref_denorm, rtol=1e-4, atol=1e-4)
    assert y_norm.dtype == jnp.float32 and y_denorm.dtype == jnp.float32
    assert y_norm.shape == x2.shape and y_denorm.shape == x2.shape

    print("KERNEL_OK")
</pallas_src>

<mosaic_0001>
module attributes {stable_mosaic.version = 11 : i64} {
  func.func @_update_masked_kernel(%arg0: i32, %arg1: i32, %arg2: memref<8x512xf32, #tpu.memory_space<vmem>>, %arg3: memref<8x512xi8, #tpu.memory_space<vmem>>, %arg4: memref<1x8x128xf32, #tpu.memory_space<vmem>>, %arg5: memref<8x512xf32, #tpu.memory_space<vmem>>, %arg6: memref<8x512xf32, #tpu.memory_space<vmem>>, %arg7: memref<8x512xf32, #tpu.memory_space<vmem>>) attributes {dimension_semantics = [#tpu.dimension_semantics<parallel>, #tpu.dimension_semantics<arbitrary>], iteration_bounds = array<i64: 2, 1>, scalar_prefetch = 0 : i64, scratch_operands = 3 : i64, tpu.core_type = #tpu.core_type<tc>, window_params = [{transform_indices = @transform_0, window_bounds = array<i64: 8, 512>}, {transform_indices = @transform_1, window_bounds = array<i64: 8, 512>}, {transform_indices = @transform_2, window_bounds = array<i64: 1, 8, 128>}]} {
    %c0_i32 = arith.constant 0 : i32
    %0 = arith.cmpi eq, %arg1, %c0_i32 : i32
    %1 = arith.extui %0 : i1 to i32
    %c0_i32_0 = arith.constant 0 : i32
    %2 = arith.cmpi ne, %1, %c0_i32_0 : i32
    scf.if %2 {
      %cst = arith.constant 0.000000e+00 : f32
      %20 = vector.broadcast %cst : f32 to vector<8x512xf32>
      %c0_18 = arith.constant 0 : index
      %c0_19 = arith.constant 0 : index
      %21 = vector.load %arg5[%c0_18, %c0_19] : memref<8x512xf32, #tpu.memory_space<vmem>>, vector<8x512xf32>
      tpu.vector_store %arg5[%c0_18, %c0_19], %20 {strides = array<i32>} : memref<8x512xf32, #tpu.memory_space<vmem>>, vector<8x512xf32>,
      %cst_20 = arith.constant 0.000000e+00 : f32
      %22 = vector.broadcast %cst_20 : f32 to vector<8x512xf32>
      %c0_21 = arith.constant 0 : index
      %c0_22 = arith.constant 0 : index
      %23 = vector.load %arg6[%c0_21, %c0_22] : memref<8x512xf32, #tpu.memory_space<vmem>>, vector<8x512xf32>
      tpu.vector_store %arg6[%c0_21, %c0_22], %22 {strides = array<i32>} : memref<8x512xf32, #tpu.memory_space<vmem>>, vector<8x512xf32>,
      %cst_23 = arith.constant 0.000000e+00 : f32
      %24 = vector.broadcast %cst_23 : f32 to vector<8x512xf32>
      %c0_24 = arith.constant 0 : index
      %c0_25 = arith.constant 0 : index
      %25 = vector.load %arg7[%c0_24, %c0_25] : memref<8x512xf32, #tpu.memory_space<vmem>>, vector<8x512xf32>
      tpu.vector_store %arg7[%c0_24, %c0_25], %24 {strides = array<i32>} : memref<8x512xf32, #tpu.memory_space<vmem>>, vector<8x512xf32>,
    } else {
    }
    %c0 = arith.constant 0 : index
    %c0_1 = arith.constant 0 : index
    %3 = vector.load %arg2[%c0, %c0_1] : memref<8x512xf32, #tpu.memory_space<vmem>>, vector<8x512xf32>
    %c0_2 = arith.constant 0 : index
    %c0_3 = arith.constant 0 : index
    %4 = vector.load %arg3[%c0_2, %c0_3] : memref<8x512xi8, #tpu.memory_space<vmem>>, vector<8x512xi8>
    %5 = arith.sitofp %4 : vector<8x512xi8> to vector<8x512xf32>
    %6 = arith.mulf %3, %5 : vector<8x512xf32>
    %c0_4 = arith.constant 0 : index
    %c0_5 = arith.constant 0 : index
    %7 = vector.load %arg5[%c0_4, %c0_5] : memref<8x512xf32, #tpu.memory_space<vmem>>, vector<8x512xf32>
    %8 = arith.addf %7, %6 : vector<8x512xf32>
    %c0_6 = arith.constant 0 : index
    %c0_7 = arith.constant 0 : index
    %9 = vector.load %arg5[%c0_6, %c0_7] : memref<8x512xf32, #tpu.memory_space<vmem>>, vector<8x512xf32>
    tpu.vector_store %arg5[%c0_6, %c0_7], %8 {strides = array<i32>} : memref<8x512xf32, #tpu.memory_space<vmem>>, vector<8x512xf32>,
    %c0_8 = arith.constant 0 : index
    %c0_9 = arith.constant 0 : index
    %10 = vector.load %arg6[%c0_8, %c0_9] : memref<8x512xf32, #tpu.memory_space<vmem>>, vector<8x512xf32>
    %11 = arith.mulf %6, %6 : vector<8x512xf32>
    %12 = arith.addf %10, %11 : vector<8x512xf32>
    %c0_10 = arith.constant 0 : index
    %c0_11 = arith.constant 0 : index
    %13 = vector.load %arg6[%c0_10, %c0_11] : memref<8x512xf32, #tpu.memory_space<vmem>>, vector<8x512xf32>
    tpu.vector_store %arg6[%c0_10, %c0_11], %12 {strides = array<i32>} : memref<8x512xf32, #tpu.memory_space<vmem>>, vector<8x512xf32>,
    %c0_12 = arith.constant 0 : index
    %c0_13 = arith.constant 0 : index
    %14 = vector.load %arg7[%c0_12, %c0_13] : memref<8x512xf32, #tpu.memory_space<vmem>>, vector<8x512xf32>
    %15 = arith.addf %14, %5 : vector<8x512xf32>
    %c0_14 = arith.constant 0 : index
    %c0_15 = arith.constant 0 : index
    %16 = vector.load %arg7[%c0_14, %c0_15] : memref<8x512xf32, #tpu.memory_space<vmem>>, vector<8x512xf32>
    tpu.vector_store %arg7[%c0_14, %c0_15], %15 {strides = array<i32>} : memref<8x512xf32, #tpu.memory_space<vmem>>, vector<8x512xf32>,
    %c0_i32_16 = arith.constant 0 : i32
    %17 = arith.cmpi eq, %arg1, %c0_i32_16 : i32
    %18 = arith.extui %17 : i1 to i32
    %c0_i32_17 = arith.constant 0 : i32
    %19 = arith.cmpi ne, %18, %c0_i32_17 : i32
    scf.if %19 {
      %c0_18 = arith.constant 0 : index
      %c0_19 = arith.constant 0 : index
      %20 = vector.load %arg5[%c0_18, %c0_19] : memref<8x512xf32, #tpu.memory_space<vmem>>, vector<8x512xf32>
      %21 = vector.shape_cast %20 : vector<8x512xf32> to vector<1x8x512xf32>
      %cst = arith.constant dense<0.000000e+00> : vector<1xf32>
      %22 = vector.multi_reduction <add>, %21, %cst [1, 2] : vector<1x8x512xf32> to vector<1xf32>
      %23 = vector.shape_cast %22 : vector<1xf32> to vector<1x1x1xf32>
      %24 = vector.extract %23[0, 0, 0] : f32 from vector<1x1x1xf32>
      %c0_20 = arith.constant 0 : index
      %c0_21 = arith.constant 0 : index
      %25 = vector.load %arg6[%c0_20, %c0_21] : memref<8x512xf32, #tpu.memory_space<vmem>>, vector<8x512xf32>
      %26 = vector.shape_cast %25 : vector<8x512xf32> to vector<1x8x512xf32>
      %cst_22 = arith.constant dense<0.000000e+00> : vector<1xf32>
      %27 = vector.multi_reduction <add>, %26, %cst_22 [1, 2] : vector<1x8x512xf32> to vector<1xf32>
      %28 = vector.shape_cast %27 : vector<1xf32> to vector<1x1x1xf32>
      %29 = vector.extract %28[0, 0, 0] : f32 from vector<1x1x1xf32>
      %c0_23 = arith.constant 0 : index
      %c0_24 = arith.constant 0 : index
      %30 = vector.load %arg7[%c0_23, %c0_24] : memref<8x512xf32, #tpu.memory_space<vmem>>, vector<8x512xf32>
      %31 = vector.shape_cast %30 : vector<8x512xf32> to vector<1x8x512xf32>
      %cst_25 = arith.constant dense<0.000000e+00> : vector<1xf32>
      %32 = vector.multi_reduction <add>, %31, %cst_25 [1, 2] : vector<1x8x512xf32> to vector<1xf32>
      %33 = vector.shape_cast %32 : vector<1xf32> to vector<1x1x1xf32>
      %34 = vector.extract %33[0, 0, 0] : f32 from vector<1x1x1xf32>
      %35 = tpu.iota {dimensions = array<i32: 2>} : vector<1x8x128xi32>
      %cst_26 = arith.constant 0.000000e+00 : f32
      %36 = vector.broadcast %cst_26 : f32 to vector<1x8x128xf32>
      %c0_i32_27 = arith.constant 0 : i32
      %37 = vector.broadcast %c0_i32_27 : i32 to vector<1x8x128xi32>
      %38 = arith.cmpi eq, %35, %37 : vector<1x8x128xi32>
      %39 = vector.broadcast %24 : f32 to vector<1x8x128xf32>
      %40 = arith.select %38, %39, %36 : vector<1x8x128xi1>, vector<1x8x128xf32>
      %c1_i32 = arith.constant 1 : i32
      %41 = vector.broadcast %c1_i32 : i32 to vector<1x8x128xi32>
      %42 = arith.cmpi eq, %35, %41 : vector<1x8x128xi32>
      %43 = vector.broadcast %29 : f32 to vector<1x8x128xf32>
      %44 = arith.select %42, %43, %40 : vector<1x8x128xi1>, vector<1x8x128xf32>
      %c2_i32 = arith.constant 2 : i32
      %45 = vector.broadcast %c2_i32 : i32 to vector<1x8x128xi32>
      %46 = arith.cmpi eq, %35, %45 : vector<1x8x128xi32>
      %47 = vector.broadcast %34 : f32 to vector<1x8x128xf32>
      %48 = arith.select %46, %47, %44 : vector<1x8x128xi1>, vector<1x8x128xf32>
      %c0_28 = arith.constant 0 : index
      %c0_29 = arith.constant 0 : index
      %c0_30 = arith.constant 0 : index
      %49 = vector.load %arg4[%c0_28, %c0_29, %c0_30] : memref<1x8x128xf32, #tpu.memory_space<vmem>>, vector<1x8x128xf32>
      tpu.vector_store %arg4[%c0_28, %c0_29, %c0_30], %48 {strides = array<i32>} : memref<1x8x128xf32, #tpu.memory_space<vmem>>, vector<1x8x128xf32>,
    } else {
    }
    return
  }
  func.func @transform_0(%arg0: i32, %arg1: i32) -> (i32, i32) {
    %c1_i32 = arith.constant 1 : i32
    %0 = arith.muli %arg0, %c1_i32 : i32
    %1 = arith.addi %0, %arg1 : i32
    %c0_i32 = arith.constant 0 : i32
    %c0_i32_0 = arith.constant 0 : i32
    return %1, %c0_i32 : i32, i32
  }
  func.func @transform_1(%arg0: i32, %arg1: i32) -> (i32, i32) {
    %c1_i32 = arith.constant 1 : i32
    %0 = arith.muli %arg0, %c1_i32 : i32
    %1 = arith.addi %0, %arg1 : i32
    %c0_i32 = arith.constant 0 : i32
    %c0_i32_0 = arith.constant 0 : i32
    return %1, %c0_i32 : i32, i32
  }
  func.func @transform_2(%arg0: i32, %arg1: i32) -> (i32, i32, i32) {
    %c0_i32 = arith.constant 0 : i32
    %c0_i32_0 = arith.constant 0 : i32
    %c0_i32_1 = arith.constant 0 : i32
    return %arg0, %c0_i32, %c0_i32_0 : i32, i32, i32
  }
}

</mosaic_0001>

<llo_original>
// kernel: tpu_custom_call.1
$region0: #{tpu_custom_call.1}
  #allocation0 [shape = 'u32[]', space=smem, size = 0x4, offset = 0x4, fixed_abs, tag = 'smem constant byte address 0x4 - core index']
  #allocation1 [shape = 'u32[72,128]{1,0:T(1,128)}', space=vmem, size = 0x9000, scoped, tag = 'internal scratch']
  #allocation2 [shape = 'f32[8,512]{1,0:T(8,128)}', space=vmem, size = 0x4000, scoped, tag = 'scratch operand']
  #allocation3 [shape = 'f32[8,512]{1,0:T(8,128)}', space=vmem, size = 0x4000, scoped, tag = 'scratch operand']
  #allocation4 [shape = 'f32[8,512]{1,0:T(8,128)}', space=vmem, size = 0x4000, scoped, tag = 'scratch operand']
  %s0 = inlined_call_operand.hbm [shape: f32[16,512], index: 0, kind: input, shape index: {}]
  %s1 = inlined_call_operand.hbm [shape: s8[16,512], index: 1, kind: input, shape index: {}]
  %s2 = inlined_call_operand.hbm [shape: f32[2,8,128], index: 2, kind: output, shape index: {}]
  %s3 = sld [smem:[#allocation0]]
  $region57: #{tpu_custom_call.1} parent=0
    _
  %s5 = ssub.s32 1, %s3
  %s6 = scalar_select 0, %s5, %s3
  $region1: #{tpu_custom_call.1} parent=0
    #allocation5 [shape = 'u8[32768]{0}', space=vmem, size = 0x8000, scoped, tag = 'input window, operand 0']
    #allocation6 [shape = 's32[2]{0}', space=sflag, size = 0x8, scoped, tag = 'scoped memory for tpu_custom_call.1']
    #allocation7 [shape = 's32[2]{0}', space=sflag, size = 0x8, scoped, tag = 'scoped memory for tpu_custom_call.1']
    #allocation8 [shape = 'u8[8192]{0}', space=vmem, size = 0x2000, scoped, tag = 'input window, operand 1']
    #allocation9 [shape = 's32[2]{0}', space=sflag, size = 0x8, scoped, tag = 'scoped memory for tpu_custom_call.1']
    #allocation10 [shape = 'u8[8192]{0}', space=vmem, size = 0x2000, scoped, tag = 'output window, operand 0']
    %7 = vsyncpa [#allocation6], 0
    %s8 = scalar_lea.sflag [#allocation6], 1
    %9 = vsyncpa %s8, 0
    %10 = vsyncpa [#allocation9], 0
    %s11 = scalar_lea.sflag [#allocation9], 1
    %12 = vsyncpa %s11, 0
    %13 = vsyncpa [#allocation7], 0
    %s14 = scalar_lea.sflag [#allocation7], 1
    %15 = vsyncpa %s14, 0
    loop: start=0, step=1, limit=4
    $region2: #{tpu_custom_call.1} parent=1 // loop_pre_header
      _
    $region3: #{tpu_custom_call.1} parent=1 // loop_header
      %s17 = sphi 0, %s21
      %p18 = scmp.ge.s32.totalorder %s17, 4
      %s24 = sphi 0, %s36
      %s25 = sphi 0, %s32
      %s26 = sphi 0, %s24
      %s27 = sphi 0, %s25
      %s28 = sphi 0, %s26
      %s29 = sphi 0, %s27
      %s41 = sphi 0, %s43
      %s44 = sphi 0, %s41
      %s45 = sphi 0, %s44
      %s61 = sphi 0, %s45
      %s69 = sphi 0, %s71
      %s72 = sphi 0, %s69
      %s73 = sphi 0, %s72
      %s89 = sphi 0, %s73
      %s95 = sphi 0, %s97
      %s98 = sphi 0, %s95
      %s99 = sphi 0, %s98
      %s115 = sphi 0, %s99
    $region4: #{tpu_custom_call.1} parent=1 // loop_header_branch
      %20 = sbr.rel (%p18) target = $region8
    $region5: #{tpu_custom_call.1} parent=1 // loop_body
      %s22 = ssub.s32 %s17, 1
      %s23 = ssub.s32 %s17, 2
      %s30 = sadd.s32 1, %s25
      %p31 = scmp.ge.s32.totalorder %s30, 1
      %s32 = scalar_select %p31, 0, %s30
      %s33 = sadd.s32 1, %s24
      %s34 = scalar_select %p31, %s33, %s24
      %p35 = scmp.ge.s32.totalorder %s34, 2
      %s36 = scalar_select %p35, 0, %s34
      %s37 = sadd.s32 %s24, %s25
      %s38 = sadd.s32 %s36, %s32
      %s39 = ssub.s32 %s37, %s38
      %p40 = scmp.eq.s32.totalorder %s39, 0
      %s42 = sadd.s32 %s41, 1
      %s43 = scalar_select %p40, %s41, %s42
      %p46 = pneg %p40
      %p47 = scmp.eq.s32.totalorder %s17, 1
      %p48 = por %p46, %p47
      %p49 = scmp.ne.s32.totalorder %s41, %s44
      %p50 = scmp.eq.s32.totalorder %s17, 0
      %p51 = por %p49, %p50
      %p52 = scmp.ne.s32.totalorder %s41, %s44
      %p53 = scmp.eq.s32.totalorder %s22, 1
      %p54 = por %p52, %p53
      %p55 = scmp.ne.s32.totalorder %s44, %s45
      %p56 = scmp.eq.s32.totalorder %s22, 0
      %p57 = por %p55, %p56
      %p58 = scmp.ne.s32.totalorder %s44, %s45
      %p59 = scmp.eq.s32.totalorder %s23, 1
      %p60 = por %p58, %p59
      %p62 = scmp.ne.s32.totalorder %s45, %s61
      %p63 = scmp.eq.s32.totalorder %s23, 0
      %p64 = por %p62, %p63
      %s65 = sadd.s32 %s24, %s25
      %s66 = sadd.s32 %s36, %s32
      %s67 = ssub.s32 %s65, %s66
      %p68 = scmp.eq.s32.totalorder %s67, 0
      %s70 = sadd.s32 %s69, 1
      %s71 = scalar_select %p68, %s69, %s70
      %p74 = pneg %p68
      %p75 = scmp.eq.s32.totalorder %s17, 1
      %p76 = por %p74, %p75
      %p77 = scmp.ne.s32.totalorder %s69, %s72
      %p78 = scmp.eq.s32.totalorder %s17, 0
      %p79 = por %p77, %p78
      %p80 = scmp.ne.s32.totalorder %s69, %s72
      %p81 = scmp.eq.s32.totalorder %s22, 1
      %p82 = por %p80, %p81
      %p83 = scmp.ne.s32.totalorder %s72, %s73
      %p84 = scmp.eq.s32.totalorder %s22, 0
      %p85 = por %p83, %p84
      %p86 = scmp.ne.s32.totalorder %s72, %s73
      %p87 = scmp.eq.s32.totalorder %s23, 1
      %p88 = por %p86, %p87
      %p90 = scmp.ne.s32.totalorder %s73, %s89
      %p91 = scmp.eq.s32.totalorder %s23, 0
      %p92 = por %p90, %p91
      %s93 = ssub.s32 %s24, %s36
      %p94 = scmp.eq.s32.totalorder %s93, 0
      %s96 = sadd.s32 %s95, 1
      %s97 = scalar_select %p94, %s95, %s96
      %p100 = pneg %p94
      %p101 = scmp.eq.s32.totalorder %s17, 1
      %p102 = por %p100, %p101
      %p103 = scmp.ne.s32.totalorder %s95, %s98
      %p104 = scmp.eq.s32.totalorder %s17, 0
      %p105 = por %p103, %p104
      %p106 = scmp.ne.s32.totalorder %s95, %s98
      %p107 = scmp.eq.s32.totalorder %s22, 1
      %p108 = por %p106, %p107
      %p109 = scmp.ne.s32.totalorder %s98, %s99
      %p110 = scmp.eq.s32.totalorder %s22, 0
      %p111 = por %p109, %p110
      %p112 = scmp.ne.s32.totalorder %s98, %s99
      %p113 = scmp.eq.s32.totalorder %s23, 1
      %p114 = por %p112, %p113
      %p116 = scmp.ne.s32.totalorder %s99, %s115
      %p117 = scmp.eq.s32.totalorder %s23, 0
      %p118 = por %p116, %p117
      %p119 = scmp.le.s32.totalorder 1, %s17
      %p120 = scmp.lt.s32.totalorder %s17, 3
      %p121 = pnand %p119, %p120
      %p122 = pneg %p121
      // Predicated region
      $region9: #{tpu_custom_call.1} parent=5 // pred_check
        _
      $region10: #{tpu_custom_call.1} parent=5 // pred_check_branch
        %124 = sbr.rel (%p121) target = $region12
      $region11: #{tpu_custom_call.1} parent=5 // pred_region
        %s125 = ssub.s32 %s17, 1
      $region12: #{tpu_custom_call.1} parent=5 // pred_fallthru
        _
      %p126 = scmp.lt.s32.totalorder %s17, 2
      // Predicated region
      $region13: #{tpu_custom_call.1} parent=5 // pred_check
        %p127 = pneg %p126
      $region14: #{tpu_custom_call.1} parent=5 // pred_check_branch
        %129 = sbr.rel (%p127) target = $region16
      $region15: #{tpu_custom_call.1} parent=5 // pred_region
        // Predicated region
        $region17: #{tpu_custom_call.1} parent=15 // pred_check
          %p130 = pneg %p51
        $region18: #{tpu_custom_call.1} parent=15 // pred_check_branch
          %132 = sbr.rel (%p130) target = $region20
        $region19: #{tpu_custom_call.1} parent=15 // pred_region
          %s133 = sand.u32 %s41, 1
          %s134 = scalar_lea.sflag [#allocation6], %s133
          %s135 = sand.u32 %s41, 1
          %s136 = smul.addr %s135, 32
          %s137 = scalar_lea.vmem [#allocation5], %s136
          %s138 = sadd.s32 %s24, %s25
          %140 = vsyncadd %s134, 0
          %s141 = smul.addr %s138, 4
          %s142 = smul.addr %s141, 8
          %s143 = scalar_lea.hbm %s0, %s142
          %s145 = sshll.u32 %s143, 4
          %s146 = int_to_ptr.hbm [resolvable:$true] %s145
          %s147 = sshll.u32 %s137, 4
          %s148 = int_to_ptr.vmem [resolvable:$true] %s147
          %150 = dma.hbm_to_vmem [thread:$0]  %s146, 512, %s148, %s134
        $region20: #{tpu_custom_call.1} parent=15 // pred_fallthru
          _
        // Predicated region
        $region21: #{tpu_custom_call.1} parent=15 // pred_check
          %p151 = pneg %p79
        $region22: #{tpu_custom_call.1} parent=15 // pred_check_branch
          %153 = sbr.rel (%p151) target = $region24
        $region23: #{tpu_custom_call.1} parent=15 // pred_region
          %s154 = sand.u32 %s69, 1
          %s155 = scalar_lea.sflag [#allocation9], %s154
          %s156 = sand.u32 %s69, 1
          %s157 = smul.addr %s156, 8
          %s158 = scalar_lea.vmem [#allocation8], %s157
          %s159 = sadd.s32 %s24, %s25
          %161 = vsyncadd %s155, 0
          %s162 = smul.addr %s159, 4
          %s163 = smul.addr %s162, 2
          %s164 = scalar_lea.hbm %s1, %s163
          %s166 = sshll.u32 %s164, 4
          %s167 = int_to_ptr.hbm [resolvable:$true] %s166
          %s168 = sshll.u32 %s158, 4
          %s169 = int_to_ptr.vmem [resolvable:$true] %s168
          %171 = dma.hbm_to_vmem [thread:$0]  %s167, 128, %s169, %s155
        $region24: #{tpu_custom_call.1} parent=15 // pred_fallthru
          _
      $region16: #{tpu_custom_call.1} parent=5 // pred_fallthru
        _
      %p172 = scmp.le.s32.totalorder 1, %s17
      %p173 = scmp.lt.s32.totalorder %s17, 3
      %p174 = pnand %p172, %p173
      %p175 = pneg %p174
      // Predicated region
      $region25: #{tpu_custom_call.1} parent=5 // pred_check
        _
      $region26: #{tpu_custom_call.1} parent=5 // pred_check_branch
        %177 = sbr.rel (%p174) target = $region28
      $region27: #{tpu_custom_call.1} parent=5 // pred_region
        %s178 = ssub.s32 %s17, 1
        %s179 = sand.u32 %s44, 1
        %s180 = scalar_lea.sflag [#allocation6], %s179
        %s181 = sand.u32 %s44, 1
        %s182 = smul.addr %s181, 32
        %s183 = scalar_lea.vmem [#allocation5], %s182
        // Predicated region
        $region29: #{tpu_custom_call.1} parent=27 // pred_check
          %p184 = pneg %p57
        $region30: #{tpu_custom_call.1} parent=27 // pred_check_branch
          %186 = sbr.rel (%p184) target = $region32
        $region31: #{tpu_custom_call.1} parent=27 // pred_region
          %188 = dma.done %s180, 512
        $region32: #{tpu_custom_call.1} parent=27 // pred_fallthru
          _
        %s189 = sand.u32 %s72, 1
        %s190 = scalar_lea.sflag [#allocation9], %s189
        %s191 = sand.u32 %s72, 1
        %s192 = smul.addr %s191, 8
        %s193 = scalar_lea.vmem [#allocation8], %s192
        // Predicated region
        $region33: #{tpu_custom_call.1} parent=27 // pred_check
          %p194 = pneg %p85
        $region34: #{tpu_custom_call.1} parent=27 // pred_check_branch
          %196 = sbr.rel (%p194) target = $region36
        $region35: #{tpu_custom_call.1} parent=27 // pred_region
          %198 = dma.done %s190, 128
        $region36: #{tpu_custom_call.1} parent=27 // pred_fallthru
          _
        %s199 = sand.u32 %s44, 1
        %s200 = scalar_lea.sflag [#allocation6], %s199
        %s201 = sand.u32 %s44, 1
        %s202 = smul.addr %s201, 32
        %s203 = scalar_lea.vmem [#allocation5], %s202
        %p204 = pneg %p57
        %p205 = pneg %p54
        %s206 = sand.u32 %s72, 1
        %s207 = scalar_lea.sflag [#allocation9], %s206
        %s208 = sand.u32 %s72, 1
        %s209 = smul.addr %s208, 8
        %s210 = scalar_lea.vmem [#allocation8], %s209
        %p211 = pneg %p85
        %p212 = pneg %p82
        %p213 = pneg %p111
        %p214 = pneg %p108
        %s215 = sand.u32 %s98, 1
        %s216 = scalar_lea.sflag [#allocation7], %s215
        %s217 = sand.u32 %s98, 1
        %s218 = smul.addr %s217, 8
        %s219 = scalar_lea.vmem [#allocation10], %s218
        %s220 = sadd.s32 %s26, %s27
        %s221 = sadd.s32 %s26, %s27
        %p222 = scmp.eq.s32.totalorder %s27, 0
        // Predicated region
        $region37: #{tpu_custom_call.1} parent=27 // pred_check
          %p223 = pneg %p222
        $region38: #{tpu_custom_call.1} parent=27 // pred_check_branch
          %225 = sbr.rel (%p223) target = $region40
        $region39: #{tpu_custom_call.1} parent=27 // pred_region
          %226 = vst [vmem:[#allocation2] sm:$0xff] 0.0
          %227 = vst [vmem:[#allocation2 + $0x8] sm:$0xff] 0.0
          %228 = vst [vmem:[#allocation2 + $0x10] sm:$0xff] 0.0
          %229 = vst [vmem:[#allocation2 + $0x18] sm:$0xff] 0.0
          %230 = vst [vmem:[#allocation3] sm:$0xff] 0.0
          %231 = vst [vmem:[#allocation3 + $0x8] sm:$0xff] 0.0
          %232 = vst [vmem:[#allocation3 + $0x10] sm:$0xff] 0.0
          %233 = vst [vmem:[#allocation3 + $0x18] sm:$0xff] 0.0
          %234 = vst [vmem:[#allocation4] sm:$0xff] 0.0
          %235 = vst [vmem:[#allocation4 + $0x8] sm:$0xff] 0.0
          %236 = vst [vmem:[#allocation4 + $0x10] sm:$0xff] 0.0
          %237 = vst [vmem:[#allocation4 + $0x18] sm:$0xff] 0.0
        $region40: #{tpu_custom_call.1} parent=27 // pred_fallthru
          _
        %v238 = vld [vmem:[%s183] sm:$0xff]
        %v239 = vld [vmem:[%s183 + $0x8] sm:$0xff]
        %v240 = vld [vmem:[%s183 + $0x10] sm:$0xff]
        %v241 = vld [vmem:[%s183 + $0x18] sm:$0xff]
        %v242 = vld [vmem:[%s193] sm:$0xff]
        %v243 = vunpack.c.0.s8 %v242
        %v244 = vunpack.c.1.s8 %v242
        %v245 = vunpack.c.2.s8 %v242
        %v246 = vunpack.c.3.s8 %v242
        %v247 = vcvt.s32.f32 %v243
        %v248 = vcvt.s32.f32 %v244
        %v249 = vcvt.s32.f32 %v245
        %v250 = vcvt.s32.f32 %v246
        %v251 = vmul.f32 %v238, %v247
        %v252 = vmul.f32 %v239, %v248
        %v253 = vmul.f32 %v240, %v249
        %v254 = vmul.f32 %v241, %v250
        %v255 = vld [vmem:[#allocation2] sm:$0xff]
        %v256 = vld [vmem:[#allocation2 + $0x8] sm:$0xff]
        %v257 = vld [vmem:[#allocation2 + $0x10] sm:$0xff]
        %v258 = vld [vmem:[#allocation2 + $0x18] sm:$0xff]
        %v259 = vadd.f32 %v255, %v251
        %v260 = vadd.f32 %v256, %v252
        %v261 = vadd.f32 %v257, %v253
        %v262 = vadd.f32 %v258, %v254
        %263 = vst [vmem:[#allocation2] sm:$0xff] %v259
        %264 = vst [vmem:[#allocation2 + $0x8] sm:$0xff] %v260
        %265 = vst [vmem:[#allocation2 + $0x10] sm:$0xff] %v261
        %266 = vst [vmem:[#allocation2 + $0x18] sm:$0xff] %v262
        %v267 = vld [vmem:[#allocation3] sm:$0xff]
        %v268 = vld [vmem:[#allocation3 + $0x8] sm:$0xff]
        %v269 = vld [vmem:[#allocation3 + $0x10] sm:$0xff]
        %v270 = vld [vmem:[#allocation3 + $0x18] sm:$0xff]
        %v271 = vmul.f32 %v251, %v251
        %v272 = vmul.f32 %v252, %v252
        %v273 = vmul.f32 %v253, %v253
        %v274 = vmul.f32 %v254, %v254
        %v275 = vadd.f32 %v267, %v271
        %v276 = vadd.f32 %v268, %v272
        %v277 = vadd.f32 %v269, %v273
        %v278 = vadd.f32 %v270, %v274
        %279 = vst [vmem:[#allocation3] sm:$0xff] %v275
        %280 = vst [vmem:[#allocation3 + $0x8] sm:$0xff] %v276
        %281 = vst [vmem:[#allocation3 + $0x10] sm:$0xff] %v277
        %282 = vst [vmem:[#allocation3 + $0x18] sm:$0xff] %v278
        %v283 = vld [vmem:[#allocation4] sm:$0xff]
        %v284 = vld [vmem:[#allocation4 + $0x8] sm:$0xff]
        %v285 = vld [vmem:[#allocation4 + $0x10] sm:$0xff]
        %v286 = vld [vmem:[#allocation4 + $0x18] sm:$0xff]
        %v287 = vadd.f32 %v283, %v247
        %v288 = vadd.f32 %v284, %v248
        %v289 = vadd.f32 %v285, %v249
        %v290 = vadd.f32 %v286, %v250
        %291 = vst [vmem:[#allocation4] sm:$0xff] %v287
        %292 = vst [vmem:[#allocation4 + $0x8] sm:$0xff] %v288
        %293 = vst [vmem:[#allocation4 + $0x10] sm:$0xff] %v289
        %294 = vst [vmem:[#allocation4 + $0x18] sm:$0xff] %v290
        // Predicated region
        $region41: #{tpu_custom_call.1} parent=27 // pred_check
          %p295 = pneg %p222
        $region42: #{tpu_custom_call.1} parent=27 // pred_check_branch
          %297 = sbr.rel (%p295) target = $region44
        $region43: #{tpu_custom_call.1} parent=27 // pred_region
          %v298 = vld [vmem:[#allocation2] sm:$0xff]
          %v299 = vld [vmem:[#allocation2 + $0x8] sm:$0xff]
          %v300 = vld [vmem:[#allocation2 + $0x10] sm:$0xff]
          %v301 = vld [vmem:[#allocation2 + $0x18] sm:$0xff]
          %v302 = vadd.f32 %v298, %v299
          %v303 = vadd.f32 %v302, %v300
          %v304 = vadd.f32 %v303, %v301
          %305 = vadd.xlane.f32.xlu0 %v304
          %v306 = vpop.xlane.xlu0 %305
          %v307 = vrot.slane %v306, 4
          %v308 = vadd.f32 %v306, %v307
          %v309 = vrot.slane %v308, 2
          %v310 = vadd.f32 %v308, %v309
          %v311 = vrot.slane %v310, 1
          %v312 = vadd.f32 %v310, %v311
          %s313 = vtos %v312
          %v314 = vld [vmem:[#allocation3] sm:$0xff]
          %v315 = vld [vmem:[#allocation3 + $0x8] sm:$0xff]
          %v316 = vld [vmem:[#allocation3 + $0x10] sm:$0xff]
          %v317 = vld [vmem:[#allocation3 + $0x18] sm:$0xff]
          %v318 = vadd.f32 %v314, %v315
          %v319 = vadd.f32 %v318, %v316
          %v320 = vadd.f32 %v319, %v317
          %321 = vadd.xlane.f32.xlu0 %v320
          %v322 = vpop.xlane.xlu0 %321
          %v323 = vrot.slane %v322, 4
          %v324 = vadd.f32 %v322, %v323
          %v325 = vrot.slane %v324, 2
          %v326 = vadd.f32 %v324, %v325
          %v327 = vrot.slane %v326, 1
          %v328 = vadd.f32 %v326, %v327
          %s329 = vtos %v328
          %v330 = vld [vmem:[#allocation4] sm:$0xff]
          %v331 = vld [vmem:[#allocation4 + $0x8] sm:$0xff]
          %v332 = vld [vmem:[#allocation4 + $0x10] sm:$0xff]
          %v333 = vld [vmem:[#allocation4 + $0x18] sm:$0xff]
          %v334 = vadd.f32 %v330, %v331
          %v335 = vadd.f32 %v334, %v332
          %v336 = vadd.f32 %v335, %v333
          %337 = vadd.xlane.f32.xlu0 %v336
          %v338 = vpop.xlane.xlu0 %337
          %v339 = vrot.slane %v338, 4
          %v340 = vadd.f32 %v338, %v339
          %v341 = vrot.slane %v340, 2
          %v342 = vadd.f32 %v340, %v341
          %v343 = vrot.slane %v342, 1
          %v344 = vadd.f32 %v342, %v343
          %s345 = vtos %v344
          %v346 = vlaneseq
          %v347 = vand.u32 %v346, 127
          %vm348 = vcmp.eq.s32.totalorder %v347, 0
          %v349 = vstv %s313
          %v350 = vsel %vm348, %v349, 0.0
          %vm351 = vcmp.eq.s32.totalorder %v347, 1
          %v352 = vstv %s329
          %v353 = vsel %vm351, %v352, %v350
          %vm354 = vcmp.eq.s32.totalorder %v347, 2
          %v355 = vstv %s345
          %v356 = vsel %vm354, %v355, %v353
          %357 = vst [vmem:[%s219] sm:$0xff] %v356
        $region44: #{tpu_custom_call.1} parent=27 // pred_fallthru
          _
        %s358 = sand.u32 %s98, 1
        %s359 = scalar_lea.sflag [#allocation7], %s358
        %s360 = sand.u32 %s98, 1
        %s361 = smul.addr %s360, 8
        %s362 = scalar_lea.vmem [#allocation10], %s361
        // Predicated region
        $region45: #{tpu_custom_call.1} parent=27 // pred_check
          %p363 = pneg %p108
        $region46: #{tpu_custom_call.1} parent=27 // pred_check_branch
          %365 = sbr.rel (%p363) target = $region48
        $region47: #{tpu_custom_call.1} parent=27 // pred_region
          %367 = vsyncadd %s359, 0
          %s368 = smul.addr %s26, 8
          %s369 = scalar_lea.hbm %s2, %s368
          %s371 = sshll.u32 %s362, 4
          %s372 = int_to_ptr.vmem [resolvable:$true] %s371
          %s373 = sshll.u32 %s369, 4
          %s374 = int_to_ptr.hbm [resolvable:$true] %s373
          %376 = dma.vmem_to_hbm [thread:$0]  %s372, 128, %s374, %s359
        $region48: #{tpu_custom_call.1} parent=27 // pred_fallthru
          _
      $region28: #{tpu_custom_call.1} parent=5 // pred_fallthru
        _
      %p377 = scmp.le.s32.totalorder 2, %s17
      // Predicated region
      $region49: #{tpu_custom_call.1} parent=5 // pred_check
        %p378 = pneg %p377
      $region50: #{tpu_custom_call.1} parent=5 // pred_check_branch
        %380 = sbr.rel (%p378) target = $region52
      $region51: #{tpu_custom_call.1} parent=5 // pred_region
        %s381 = ssub.s32 %s17, 2
        // Predicated region
        $region53: #{tpu_custom_call.1} parent=51 // pred_check
          %p382 = pneg %p114
        $region54: #{tpu_custom_call.1} parent=51 // pred_check_branch
          %384 = sbr.rel (%p382) target = $region56
        $region55: #{tpu_custom_call.1} parent=51 // pred_region
          %s385 = sand.u32 %s99, 1
          %s386 = scalar_lea.sflag [#allocation7], %s385
          %s387 = sand.u32 %s99, 1
          %s388 = smul.addr %s387, 8
          %s389 = scalar_lea.vmem [#allocation10], %s388
          %391 = dma.done %s386, 128
        $region56: #{tpu_custom_call.1} parent=51 // pred_fallthru
          _
      $region52: #{tpu_custom_call.1} parent=5 // pred_fallthru
        _
    $region6: #{tpu_custom_call.1} parent=1 // loop_footer
      %s21 = sadd.s32 1, %s17
    $region7: #{tpu_custom_call.1} parent=1 // loop_footer_branch
      %16 = sbr.rel target = $region3
    $region8: #{tpu_custom_call.1} parent=1 // loop_exit
      _
    %392 = vsyncpa [#allocation6], 1
    %s393 = scalar_lea.sflag [#allocation6], 1
    %394 = vsyncpa %s393, 1
    %395 = vsyncpa [#allocation9], 1
    %s396 = scalar_lea.sflag [#allocation9], 1
    %397 = vsyncpa %s396, 1
    %398 = vsyncpa [#allocation7], 1
    %s399 = scalar_lea.sflag [#allocation7], 1
    %400 = vsyncpa %s399, 1

</llo_original>
